<compile_context>
chip_gen: v5e
topology: v5e:2x2
jax: 0.10.0
libtpu: 0.0.40
codegen_flags: <defaults>
</compile_context>

<pallas_src>
import functools

import jax
import jax.numpy as jnp
from jax.experimental import pallas as pl
from jax.experimental.pallas import tpu as pltpu


def _focal_loss_kernel(n_ref, logits_ref, target_ref, out_ref, *, gamma):
    # n_ref      : (1,) int32 scalar-prefetch (SMEM) -- true batch size
    # logits_ref : (T, C) native-dtype logits block (VMEM)
    # target_ref : (T, 1) int32 class indices (VMEM)
    # out_ref    : (1, 8, 128) float32 partial-sum block for this tile (VMEM)
    i = pl.program_id(0)

    x = logits_ref[...].astype(jnp.float32)                    # (T, C) in-register upcast
    t = target_ref[...]                                        # (T, 1) int32
    T, C = x.shape

    # Numerically stable log-softmax pieces.  The (T,C) exp has a single
    # consumer (the row-sum), so it can fuse instead of materializing.
    m = jnp.max(x, axis=-1, keepdims=True)                     # (T, 1)
    z = x - m                                                  # (T, C)
    sum_e = jnp.sum(jnp.exp(z), axis=-1, keepdims=True)        # (T, 1)

    # Target logit via a one-hot lane mask (log-space only; no tgt_e path).
    # NOTE: out-of-range targets silently give ce = logsumexp (pt ~ max prob),
    # unlike torch.nn.functional.cross_entropy which raises.
    col = jax.lax.broadcasted_iota(jnp.int32, (T, C), 1)       # (T, C)
    tgt_z = jnp.sum(jnp.where(col == t, z, 0.0),
                    axis=-1, keepdims=True)                    # (T, 1)

    # ce = -log p_t (clamped >= 0); pt recovered with a tiny (T,1) EUP exp.
    ce = jnp.maximum(jnp.log(sum_e) - tgt_z, 0.0)              # (T, 1)
    pt = jnp.exp(-ce)                                          # (T, 1)
    w = 1.0 - pt                                               # >= 0 since ce >= 0

    g = float(gamma)
    if g.is_integer() and 0 <= int(g) <= 16:
        wg = jnp.ones_like(w)
        for _ in range(int(g)):            # gamma=2 -> w*w : pure VPU muls
            wg = wg * w
    else:
        wg = jnp.power(w, g)               # non-integer gamma fallback

    fl = wg * ce                                               # (T, 1)

    # Only the last tile can be ragged.  All reductions above are row-local,
    # so any garbage / NaN in padded rows stays confined per-row; this cheap
    # (T,1) SELECT (not a multiply) drops those rows before the cross-row sum.
    row = jax.lax.broadcasted_iota(jnp.int32, (T, 1), 0) + i * T
    fl = jnp.where(row < n_ref[0], fl, 0.0)                    # (T, 1)

    # Per-tile partial sum splatted across a lane-aligned block; no iota/where
    # scatter epilogue.  Wrapper reads element [:, 0, 0].
    out_ref[...] = jnp.full((1, 8, 128), jnp.sum(fl), dtype=jnp.float32)


def _round_up(v, m):
    return (v + m - 1) // m * m


def _vmem_capacity_bytes():
    try:
        return int(pltpu.get_tpu_info().vmem_capacity_bytes)
    except Exception:
        return 64 * 1024 * 1024  # conservative (v7x-sized) fallback


def focal_loss(logits, target, gamma=2.0, tile_rows=None):
    """logits: (N, C) float32/bfloat16, target: (N,) int. Returns scalar f32."""
    N, C = logits.shape
    target2d = target.astype(jnp.int32).reshape(N, 1)
    n_valid = jnp.array([N], dtype=jnp.int32)      # runtime scalar, SMEM-prefetched

    itemsize = jnp.dtype(logits.dtype).itemsize
    c_pad = _round_up(C, 128)                      # lane-padded class dim

    # Generation-aware budgets: v5e/v6e have 128 MiB physical VMEM, v7x 64 MiB.
    vmem_cap = _vmem_capacity_bytes()
    if vmem_cap >= 96 * 1024 * 1024:               # v5e / v6e
        vmem_limit = 64 * 1024 * 1024
        live_budget = 48 * 1024 * 1024
    else:                                          # v7x
        vmem_limit = 32 * 1024 * 1024
        live_budget = 24 * 1024 * 1024

    if tile_rows is None:
        # Live VMEM per tile row: 2x double-buffered native logits row,
        # ~3x f32 (row, c_pad) intermediates (upcast x, z, exp headroom),
        # and the double-buffered int32 target row (lane-padded).
        row_bytes = 2 * c_pad * itemsize + 3 * c_pad * 4 + 2 * 128 * 4
        tile_rows = max(live_budget // row_bytes, 8)
    tile_rows = max((int(tile_rows) // 8) * 8, 8)
    tile_rows = min(tile_rows, _round_up(N, 8))
    if N > 8:
        # Guarantee grid >= 2 so the "parallel" batch axis can shard across
        # both TensorCores on v7x (costs ~1 extra grid step elsewhere).
        tile_rows = min(tile_rows, _round_up(pl.cdiv(N, 2), 8))
    tile_rows = max(tile_rows, 8)
    grid = pl.cdiv(N, tile_rows)

    # TODO(synk): for vocab-scale C (a (8, c_pad) f32 block overflows the
    # budget) add a second "arbitrary" grid axis over C with an online
    # max/sum accumulator instead of loading full rows.
    # TODO(synk): for tiny C (e.g. 32/64 classes) fold k rows into the 128-lane
    # dim (reshape (N, C) -> (N/k, k*C)) with segmented row reductions to
    # recover full lane occupancy.

    partials = pl.pallas_call(
        functools.partial(_focal_loss_kernel, gamma=float(gamma)),
        out_shape=jax.ShapeDtypeStruct((grid, 8, 128), jnp.float32),
        grid_spec=pltpu.PrefetchScalarGridSpec(
            num_scalar_prefetch=1,
            grid=(grid,),
            in_specs=[
                pl.BlockSpec((tile_rows, C), lambda i, n: (i, 0)),
                pl.BlockSpec((tile_rows, 1), lambda i, n: (i, 0)),
            ],
            out_specs=pl.BlockSpec((1, 8, 128), lambda i, n: (i, 0, 0)),
        ),
        compiler_params=pltpu.CompilerParams(
            dimension_semantics=("parallel",),
            vmem_limit_bytes=vmem_limit,
        ),
    )(n_valid, logits, target2d)

    return jnp.sum(partials[:, 0, 0]) / jnp.float32(N)


def _focal_loss_ref(logits, target, gamma=2.0):
    # Pure-JAX reference (mirrors F.cross_entropy + focal weighting).
    logp = jax.nn.log_softmax(logits.astype(jnp.float32), axis=-1)
    ce = -jnp.take_along_axis(logp, target[:, None].astype(jnp.int32), axis=-1)[:, 0]
    pt = jnp.exp(-ce)
    return jnp.mean(((1.0 - pt) ** gamma) * ce)


if __name__ == "__main__":
    key = jax.random.PRNGKey(0)
    k1, k2, k3, k4 = jax.random.split(key, 4)

    # Small shape matching the module's (batch, num_classes) usage.
    N, C = 8, 32
    logits = jax.random.normal(k1, (N, C), dtype=jnp.float32)
    target = jax.random.randint(k2, (N,), 0, C, dtype=jnp.int32)

    loss = focal_loss(logits, target, gamma=2.0)
    jax.block_until_ready(loss)
    ref = _focal_loss_ref(logits, target, gamma=2.0)
    assert jnp.allclose(loss, ref, atol=1e-5, rtol=1e-5), (loss, ref)

    # Multi-tile + ragged-batch path (exercises grid, row masking, mean).
    N2, C2 = 300, 64
    logits2 = jax.random.normal(k3, (N2, C2), dtype=jnp.float32)
    target2 = jax.random.randint(k4, (N2,), 0, C2, dtype=jnp.int32)
    loss2 = focal_loss(logits2, target2, gamma=2.0, tile_rows=128)
    jax.block_until_ready(loss2)
    ref2 = _focal_loss_ref(logits2, target2, gamma=2.0)
    assert jnp.allclose(loss2, ref2, atol=1e-5, rtol=1e-4), (loss2, ref2)

    print("KERNEL_OK")
</pallas_src>

<mosaic_0001>
module attributes {stable_mosaic.version = 11 : i64} {
  func.func @_focal_loss_kernel(%arg0: i32, %arg1: memref<1xi32, #tpu.memory_space<smem>>, %arg2: memref<8x32xf32, #tpu.memory_space<vmem>>, %arg3: memref<8x1xi32, #tpu.memory_space<vmem>>, %arg4: memref<1x8x128xf32, #tpu.memory_space<vmem>>) attributes {dimension_semantics = [#tpu.dimension_semantics<parallel>], iteration_bounds = array<i64: 1>, scalar_prefetch = 1 : i64, scratch_operands = 0 : i64, tpu.core_type = #tpu.core_type<tc>, window_params = [{transform_indices = @transform_0, window_bounds = array<i64: 8, 32>}, {transform_indices = @transform_1, window_bounds = array<i64: 8, 1>}, {transform_indices = @transform_2, window_bounds = array<i64: 1, 8, 128>}]} {
    %c0 = arith.constant 0 : index
    %c0_0 = arith.constant 0 : index
    %0 = vector.load %arg2[%c0, %c0_0] : memref<8x32xf32, #tpu.memory_space<vmem>>, vector<8x32xf32>
    %c0_1 = arith.constant 0 : index
    %c0_2 = arith.constant 0 : index
    %1 = vector.load %arg3[%c0_1, %c0_2] : memref<8x1xi32, #tpu.memory_space<vmem>>, vector<8x1xi32>
    %cst = arith.constant dense<0xFF800000> : vector<8xf32>
    %2 = vector.multi_reduction <maximumf>, %0, %cst [1] : vector<8x32xf32> to vector<8xf32>
    %3 = vector.shape_cast %2 : vector<8xf32> to vector<8x1xf32>
    %4 = vector.broadcast %3 : vector<8x1xf32> to vector<8x32xf32>
    %5 = arith.subf %0, %4 : vector<8x32xf32>
    %6 = math.exp %5 : vector<8x32xf32>
    %cst_3 = arith.constant dense<0.000000e+00> : vector<8xf32>
    %7 = vector.multi_reduction <add>, %6, %cst_3 [1] : vector<8x32xf32> to vector<8xf32>
    %8 = vector.shape_cast %7 : vector<8xf32> to vector<8x1xf32>
    %9 = tpu.iota {dimensions = array<i32: 1>} : vector<8x32xi32>
    %10 = vector.broadcast %1 : vector<8x1xi32> to vector<8x32xi32>
    %11 = arith.cmpi eq, %9, %10 : vector<8x32xi32>
    %cst_4 = arith.constant 0.000000e+00 : f32
    %12 = vector.broadcast %cst_4 : f32 to vector<8x32xf32>
    %13 = arith.select %11, %5, %12 : vector<8x32xi1>, vector<8x32xf32>
    %cst_5 = arith.constant dense<0.000000e+00> : vector<8xf32>
    %14 = vector.multi_reduction <add>, %13, %cst_5 [1] : vector<8x32xf32> to vector<8xf32>
    %15 = vector.shape_cast %14 : vector<8xf32> to vector<8x1xf32>
    %16 = math.log %8 : vector<8x1xf32>
    %17 = arith.subf %16, %15 : vector<8x1xf32>
    %cst_6 = arith.constant 0.000000e+00 : f32
    %18 = vector.broadcast %cst_6 : f32 to vector<8x1xf32>
    %19 = arith.maximumf %17, %18 : vector<8x1xf32>
    %cst_7 = arith.constant 0.000000e+00 : f32
    %20 = vector.broadcast %cst_7 : f32 to vector<8x1xf32>
    %21 = arith.subf %20, %19 : vector<8x1xf32>
    %22 = math.exp %21 : vector<8x1xf32>
    %cst_8 = arith.constant 1.000000e+00 : f32
    %23 = vector.broadcast %cst_8 : f32 to vector<8x1xf32>
    %24 = arith.subf %23, %22 : vector<8x1xf32>
    %cst_9 = arith.constant 1.000000e+00 : f32
    %25 = vector.broadcast %cst_9 : f32 to vector<8x1xf32>
    %26 = arith.mulf %25, %24 : vector<8x1xf32>
    %27 = arith.mulf %26, %24 : vector<8x1xf32>
    %28 = arith.mulf %27, %19 : vector<8x1xf32>
    %29 = tpu.iota {dimensions = array<i32: 0>} : vector<8x1xi32>
    %c8_i32 = arith.constant 8 : i32
    %30 = arith.muli %arg0, %c8_i32 : i32
    %31 = vector.broadcast %30 : i32 to vector<8x1xi32>
    %32 = arith.addi %29, %31 : vector<8x1xi32>
    %c0_10 = arith.constant 0 : index
    %33 = memref.load %arg1[%c0_10] : memref<1xi32, #tpu.memory_space<smem>>
    %34 = vector.broadcast %33 : i32 to vector<8x1xi32>
    %35 = arith.cmpi slt, %32, %34 : vector<8x1xi32>
    %cst_11 = arith.constant 0.000000e+00 : f32
    %36 = vector.broadcast %cst_11 : f32 to vector<8x1xf32>
    %37 = arith.select %35, %28, %36 : vector<8x1xi1>, vector<8x1xf32>
    %38 = vector.shape_cast %37 : vector<8x1xf32> to vector<1x8x1xf32>
    %cst_12 = arith.constant dense<0.000000e+00> : vector<1xf32>
    %39 = vector.multi_reduction <add>, %38, %cst_12 [1, 2] : vector<1x8x1xf32> to vector<1xf32>
    %40 = vector.shape_cast %39 : vector<1xf32> to vector<1x1x1xf32>
    %41 = vector.extract %40[0, 0, 0] : f32 from vector<1x1x1xf32>
    %42 = vector.broadcast %41 : f32 to vector<1x8x128xf32>
    %c0_13 = arith.constant 0 : index
    %c0_14 = arith.constant 0 : index
    %c0_15 = arith.constant 0 : index
    %43 = vector.load %arg4[%c0_13, %c0_14, %c0_15] : memref<1x8x128xf32, #tpu.memory_space<vmem>>, vector<1x8x128xf32>
    tpu.vector_store %arg4[%c0_13, %c0_14, %c0_15], %42 {strides = array<i32>} : memref<1x8x128xf32, #tpu.memory_space<vmem>>, vector<1x8x128xf32>,
    return
  }
  func.func @transform_0(%arg0: i32, %arg1: memref<1xi32, #tpu.memory_space<smem>>) -> (i32, i32) {
    %c0_i32 = arith.constant 0 : i32
    %c0_i32_0 = arith.constant 0 : i32
    return %arg0, %c0_i32 : i32, i32
  }
  func.func @transform_1(%arg0: i32, %arg1: memref<1xi32, #tpu.memory_space<smem>>) -> (i32, i32) {
    %c0_i32 = arith.constant 0 : i32
    %c0_i32_0 = arith.constant 0 : i32
    return %arg0, %c0_i32 : i32, i32
  }
  func.func @transform_2(%arg0: i32, %arg1: memref<1xi32, #tpu.memory_space<smem>>) -> (i32, i32, i32) {
    %c0_i32 = arith.constant 0 : i32
    %c0_i32_0 = arith.constant 0 : i32
    %c0_i32_1 = arith.constant 0 : i32
    return %arg0, %c0_i32, %c0_i32_0 : i32, i32, i32
  }
}

</mosaic_0001>

<llo_original>
// kernel: tpu_custom_call.1
$region0: #{tpu_custom_call.1}
  #allocation0 [shape = 'u32[]', space=smem, size = 0x4, offset = 0x4, fixed_abs, tag = 'smem constant byte address 0x4 - core index']
  #allocation1 [shape = 'u32[72,128]{1,0:T(1,128)}', space=vmem, size = 0x9000, scoped, tag = 'internal scratch']
  #allocation2 [shape = 's32[1]{0}', space=sflag, size = 0x4, scoped, tag = 'scoped memory for tpu_custom_call.1']
  #allocation3 [shape = 's32[1]{0:T(128)S(6)}', space=smem, size = 0x200, scoped, tag = 'prefetched SMEM operand 0']
  %s0 = inlined_call_operand.<no memory space> [shape: s32[1], index: 0, kind: input, shape index: {}]
  %s1 = inlined_call_operand.vmem [shape: f32[8,32], index: 1, kind: input, shape index: {}]
  %s2 = inlined_call_operand.vmem [shape: s32[8,1], index: 2, kind: input, shape index: {}]
  %s3 = inlined_call_operand.hbm [shape: f32[1,8,128], index: 3, kind: output, shape index: {}]
  %s4 = sld [smem:[#allocation0]]
  $region18: #{tpu_custom_call.1} parent=0
    _
  %s6 = ssub.s32 1, %s4
  %s7 = scalar_select 0, %s6, %s4
  %8 = sst [smem:[#allocation3]] %s0
  $region1: #{tpu_custom_call.1} parent=0
    #allocation4 [shape = 'u8[4096]{0}', space=vmem, size = 0x1000, scoped, tag = 'output window, operand 0, single buffered']
    #allocation5 [shape = 's32[1]{0}', space=sflag, size = 0x4, scoped, tag = 'scoped memory for tpu_custom_call.1']
    %9 = vsyncpa [#allocation5], 0
    // Predicated region
    $region2: #{tpu_custom_call.1} parent=1 // pred_check
      _
    $region3: #{tpu_custom_call.1} parent=1 // pred_check_branch
      %11 = sbr.rel (0) target = $region5
    $region4: #{tpu_custom_call.1} parent=1 // pred_region
      _
    $region5: #{tpu_custom_call.1} parent=1 // pred_fallthru
      _
    // Predicated region
    $region6: #{tpu_custom_call.1} parent=1 // pred_check
      _
    $region7: #{tpu_custom_call.1} parent=1 // pred_check_branch
      %13 = sbr.rel (0) target = $region9
    $region8: #{tpu_custom_call.1} parent=1 // pred_region
      _
    $region9: #{tpu_custom_call.1} parent=1 // pred_fallthru
      _
    %v14 = vld [vmem:[%s1] sm:$0xff]
    %v15 = vld [vmem:[%s2] sm:$0xff]
    %vm16 = vcmask 261120
    %v17 = vsel %vm16, %v14, -inf
    %18 = vmax.xlane.f32.xlu0 %v17
    %v19 = vpop.xlane.xlu0 %18
    %v20 = vsub.f32 %v14, %v19
    %v21 = vmul.f32 %v20, 1.442695
    %v22 = vpow.pop %v21
    %v23 = vsel %vm16, %v22, 0.0
    %24 = vadd.xlane.f32.xlu0 %v23
    %v25 = vpop.xlane.xlu0 %24
    %v26 = vlaneseq
    %v27 = vand.u32 %v26, 127
    %28 = vset.pattern.permute.xlu0 0
    %29 = vperm.xlu0 %28, %v15
    %v30 = vpop.permute.xlu0 %29
    %vm31 = vcmp.eq.s32.totalorder %v27, %v30
    %v32 = vsel %vm31, %v20, 0.0
    %v33 = vsel %vm16, %v32, 0.0
    %34 = vadd.xlane.f32.xlu0 %v33
    %v35 = vpop.xlane.xlu0 %34
    %v36 = vlog2.pop %v25
    %v37 = vmul.f32 %v36, 0.6931472
    %v38 = vsub.f32 %v37, %v35
    %v39 = vmax.f32 %v38, 0.0
    %v40 = vsub.f32 0.0, %v39
    %v41 = vmul.f32 %v40, 1.442695
    %v42 = vpow.pop %v41
    %v43 = vsub.f32 1.0, %v42
    %v44 = vmul.f32 %v43, %v43
    %v45 = vmul.f32 %v44, %v39
    %v46 = vlaneseq
    %v47 = vshrl.u32 %v46, 7
    %s48 = smul.u32 0, 8
    %v49 = vstv %s48
    %v50 = vadd.s32 %v47, %v49
    %s51 = sld [smem:[#allocation3]]
    %v52 = vstv %s51
    %vm53 = vcmp.lt.s32.totalorder %v50, %v52
    %v54 = vsel %vm53, %v45, 0.0
    %vm55 = vcmask 7168
    %v56 = vsel %vm55, %v54, 0.0
    %57 = vadd.xlane.f32.xlu0 %v56
    %v58 = vpop.xlane.xlu0 %57
    %v59 = vrot.slane %v58, 4
    %v60 = vadd.f32 %v58, %v59
    %v61 = vrot.slane %v60, 2
    %v62 = vadd.f32 %v60, %v61
    %v63 = vrot.slane %v62, 1
    %v64 = vadd.f32 %v62, %v63
    %s65 = vtos %v64
    %v66 = vstv %s65
    %67 = vst [vmem:[#allocation4] sm:$0xff] %v66
    // Predicated region
    $region10: #{tpu_custom_call.1} parent=1 // pred_check
      _
    $region11: #{tpu_custom_call.1} parent=1 // pred_check_branch
      %69 = sbr.rel (0) target = $region13
    $region12: #{tpu_custom_call.1} parent=1 // pred_region
      %71 = vsyncadd [#allocation5], 0
      %s73 = sshll.u32 [#allocation4], 4
      %s74 = int_to_ptr.vmem [resolvable:$true] %s73
      %s75 = sshll.u32 %s3, 4
      %s76 = int_to_ptr.hbm [resolvable:$true] %s75
      %78 = dma.vmem_to_hbm [thread:$0]  %s74, 128, %s76, [#allocation5]
    $region13: #{tpu_custom_call.1} parent=1 // pred_fallthru
      _
    // Predicated region
    $region14: #{tpu_custom_call.1} parent=1 // pred_check
      _
    $region15: #{tpu_custom_call.1} parent=1 // pred_check_branch
      %80 = sbr.rel (0) target = $region17
    $region16: #{tpu_custom_call.1} parent=1 // pred_region
      %82 = dma.done [#allocation5], 128
    $region17: #{tpu_custom_call.1} parent=1 // pred_fallthru
      _
    %83 = vsyncpa [#allocation5], 1

</llo_original>
